<compile_context>
chip_gen: v7x
topology: tpu7x:2x2x1
jax: 0.10.0
libtpu: 0.0.40
codegen_flags: <defaults>
</compile_context>

<pallas_src>
import functools

import jax
import jax.numpy as jnp
from jax.experimental import pallas as pl
from jax.experimental.pallas import tpu as pltpu

LANE = 128  # lane width / feature-padding granularity


def _round_up(v, m):
    return ((v + m - 1) // m) * m


def _mlp_kernel(x_ref, w1_ref, b1_ref, w2_ref, b2_ref, o_ref, *, bf16_tanh):
    f32 = jnp.float32
    bf16 = jnp.bfloat16

    x = x_ref[...].astype(bf16)                                       # [tm, din] -> bf16 for MXU
    # linear_1 -> dropout(eval = identity) -> tanh
    h = jnp.dot(x, w1_ref[...], preferred_element_type=f32) + b1_ref[...]
    if bf16_tanh:                                                     # v6e/v7x: bf16 EUP
        h = jnp.tanh(h.astype(bf16))
    else:                                                             # v5e: f32 is the fast path
        h = jnp.tanh(h).astype(bf16)
    # linear_2 -> dropout(eval = identity) -> tanh
    y = jnp.dot(h, w2_ref[...], preferred_element_type=f32) + b2_ref[...]
    if bf16_tanh:
        o_ref[...] = jnp.tanh(y.astype(bf16))                         # bf16, lane-dense store
    else:
        o_ref[...] = jnp.tanh(y).astype(bf16)


def prepare_params(params):
    """One-time weight prep (pad to 128 lanes, transpose to [in, out], cast to bf16).

    Call ONCE and reuse the returned arrays across forward calls; this keeps
    the per-call path free of the padding / transpose / cast XLA ops.
    Returns (padded_params, dim_out).
    """
    (w1, b1), (w2, b2) = params
    hdim, din = w1.shape
    dout = w2.shape[0]
    h_p = _round_up(hdim, LANE)
    dout_p = _round_up(dout, LANE)

    bf16 = jnp.bfloat16
    f32 = jnp.float32
    # Zero padding is semantics-preserving: padded hidden cols get tanh(0)=0
    # and multiply zero W2 rows; padded output cols are sliced off.
    w1t = jnp.zeros((din, h_p), bf16).at[:, :hdim].set(w1.T.astype(bf16))
    b1p = jnp.zeros((1, h_p), f32).at[:, :hdim].set(b1)
    w2t = jnp.zeros((h_p, dout_p), bf16).at[:hdim, :dout].set(w2.T.astype(bf16))
    b2p = jnp.zeros((1, dout_p), f32).at[:, :dout].set(b2)
    return (w1t, b1p, w2t, b2p), dout


def use_bf16_tanh():
    """bf16 tanh only where the EUP/VPU support bf16 (v6e / v7x, not v5)."""
    kind = jax.devices()[0].device_kind.lower()
    return "v5" not in kind


@functools.partial(jax.jit, static_argnames=("dout", "tm", "bf16_tanh"))
def mlp_forward(x, padded_params, *, dout, tm=256, bf16_tanh=True):
    """x: [N, dim_in] f32.  padded_params: output of prepare_params()[0]."""
    w1t, b1p, w2t, b2p = padded_params
    n, din = x.shape
    assert w1t.shape[0] == din
    h_p = w1t.shape[1]
    dout_p = w2t.shape[1]

    # Keep the row tile no larger than needed for tiny batches.
    tm = max(8, min(tm, _round_up(n, 8)))
    n_p = _round_up(n, tm)
    if n_p != n:  # only pad rows when required (no-op copy otherwise)
        x = jnp.zeros((n_p, din), x.dtype).at[:n, :].set(x)

    grid = (n_p // tm,)
    cost = pl.CostEstimate(
        flops=2 * n_p * (din * h_p + h_p * dout_p),
        transcendentals=n_p * (h_p + dout_p),
        bytes_accessed=(n_p * din * 4 + w1t.size * 2 + w2t.size * 2
                        + b1p.size * 4 + b2p.size * 4 + n_p * dout_p * 2),
    )

    out_p = pl.pallas_call(
        functools.partial(_mlp_kernel, bf16_tanh=bf16_tanh),
        out_shape=jax.ShapeDtypeStruct((n_p, dout_p), jnp.bfloat16),
        grid_spec=pltpu.PrefetchScalarGridSpec(
            num_scalar_prefetch=0,
            grid=grid,
            in_specs=[
                pl.BlockSpec((tm, din), lambda i: (i, 0)),       # x row tile (un-padded K)
                pl.BlockSpec((din, h_p), lambda i: (0, 0)),      # W1 pinned
                pl.BlockSpec((1, h_p), lambda i: (0, 0)),        # b1 pinned
                pl.BlockSpec((h_p, dout_p), lambda i: (0, 0)),   # W2 pinned
                pl.BlockSpec((1, dout_p), lambda i: (0, 0)),     # b2 pinned
            ],
            out_specs=pl.BlockSpec((tm, dout_p), lambda i: (i, 0)),
        ),
        compiler_params=pltpu.CompilerParams(
            dimension_semantics=("parallel",),        # shard row tiles across TCs on v7x
            vmem_limit_bytes=32 * 1024 * 1024,
        ),
        cost_estimate=cost,
    )(x, w1t, b1p, w2t, b2p)

    # Minor extra pass; defer/fuse into the consumer if it accepts the padded buffer.
    return out_p[:n, :dout]


def init_linear(key, fan_in, fan_out):
    """PyTorch-Linear-style init: U(-1/sqrt(fan_in), 1/sqrt(fan_in))."""
    k1, k2 = jax.random.split(key)
    bound = 1.0 / float(fan_in) ** 0.5
    w = jax.random.uniform(k1, (fan_out, fan_in), jnp.float32, -bound, bound)
    b = jax.random.uniform(k2, (fan_out,), jnp.float32, -bound, bound)
    return w, b


def mlp_reference(x, params):
    """Pure-JAX f32 reference of MLP.forward (dropout in eval mode)."""
    (w1, b1), (w2, b2) = params
    h = jnp.tanh(x @ w1.T + b1)
    return jnp.tanh(h @ w2.T + b2)


if __name__ == "__main__":
    key = jax.random.PRNGKey(0)
    N = 1024                # tm=256 -> grid=(4,): >=2 steps so both v7x TCs get work
    dim_in = 16
    num_hidden = 32
    dim_out = 8

    k_x, k_l1, k_l2 = jax.random.split(key, 3)
    x = jax.random.normal(k_x, (N, dim_in), jnp.float32)
    params = (
        init_linear(k_l1, dim_in, num_hidden),   # linear_1
        init_linear(k_l2, num_hidden, dim_out),  # linear_2
    )

    # One-time weight prep (hoisted out of the per-call path).
    padded_params, dout = prepare_params(params)
    padded_params = jax.block_until_ready(padded_params)

    fwd = functools.partial(mlp_forward, dout=dout, tm=256,
                            bf16_tanh=use_bf16_tanh())
    out = fwd(x, padded_params)
    jax.block_until_ready(out)

    assert out.shape == (N, dim_out)
    assert out.dtype == jnp.bfloat16
    out_f32 = out.astype(jnp.float32)
    assert bool(jnp.all(jnp.isfinite(out_f32)))

    ref = mlp_reference(x, params)
    max_err = float(jnp.max(jnp.abs(out_f32 - ref)))
    assert max_err < 5e-2, f"mismatch vs reference: {max_err}"

    print("KERNEL_OK")
</pallas_src>

<mosaic_0001>
module attributes {stable_mosaic.version = 11 : i64} {
  func.func @_mlp_kernel(%arg0: i32, %arg1: memref<256x16xf32, #tpu.memory_space<vmem>>, %arg2: memref<16x128xbf16, #tpu.memory_space<vmem>>, %arg3: memref<1x128xf32, #tpu.memory_space<vmem>>, %arg4: memref<128x128xbf16, #tpu.memory_space<vmem>>, %arg5: memref<1x128xf32, #tpu.memory_space<vmem>>, %arg6: memref<256x128xbf16, #tpu.memory_space<vmem>>) attributes {dimension_semantics = [#tpu.dimension_semantics<parallel>], iteration_bounds = array<i64: 4>, scalar_prefetch = 0 : i64, scratch_operands = 0 : i64, tpu.core_type = #tpu.core_type<tc>, window_params = [{transform_indices = @transform_0, window_bounds = array<i64: 256, 16>}, {pipeline_mode = #tpu.pipeline_mode<synchronous>, transform_indices = @transform_1, window_bounds = array<i64: 16, 128>}, {pipeline_mode = #tpu.pipeline_mode<synchronous>, transform_indices = @transform_2, window_bounds = array<i64: 1, 128>}, {pipeline_mode = #tpu.pipeline_mode<synchronous>, transform_indices = @transform_3, window_bounds = array<i64: 128, 128>}, {pipeline_mode = #tpu.pipeline_mode<synchronous>, transform_indices = @transform_4, window_bounds = array<i64: 1, 128>}, {transform_indices = @transform_5, window_bounds = array<i64: 256, 128>}]} {
    %c0 = arith.constant 0 : index
    %c0_0 = arith.constant 0 : index
    %0 = vector.load %arg1[%c0, %c0_0] : memref<256x16xf32, #tpu.memory_space<vmem>>, vector<256x16xf32>
    %1 = arith.truncf %0 : vector<256x16xf32> to vector<256x16xbf16>
    %c0_1 = arith.constant 0 : index
    %c0_2 = arith.constant 0 : index
    %2 = vector.load %arg2[%c0_1, %c0_2] : memref<16x128xbf16, #tpu.memory_space<vmem>>, vector<16x128xbf16>
    %cst = arith.constant dense<0.000000e+00> : vector<256x128xf32>
    %3 = tpu.matmul %1, %2, %cst {dimension_numbers = #tpu.dot_dimension_numbers<[1], [0], [0], [1], [0, 0, 1, 1], [], []>} : vector<256x16xbf16>, vector<16x128xbf16>, vector<256x128xf32> -> vector<256x128xf32>
    %c0_3 = arith.constant 0 : index
    %c0_4 = arith.constant 0 : index
    %4 = vector.load %arg3[%c0_3, %c0_4] : memref<1x128xf32, #tpu.memory_space<vmem>>, vector<1x128xf32>
    %5 = vector.broadcast %4 : vector<1x128xf32> to vector<256x128xf32>
    %6 = arith.addf %3, %5 : vector<256x128xf32>
    %7 = arith.truncf %6 : vector<256x128xf32> to vector<256x128xbf16>
    %8 = math.tanh %7 : vector<256x128xbf16>
    %c0_5 = arith.constant 0 : index
    %c0_6 = arith.constant 0 : index
    %9 = vector.load %arg4[%c0_5, %c0_6] : memref<128x128xbf16, #tpu.memory_space<vmem>>, vector<128x128xbf16>
    %cst_7 = arith.constant dense<0.000000e+00> : vector<256x128xf32>
    %10 = tpu.matmul %8, %9, %cst_7 {dimension_numbers = #tpu.dot_dimension_numbers<[1], [0], [0], [1], [0, 0, 1, 1], [], []>} : vector<256x128xbf16>, vector<128x128xbf16>, vector<256x128xf32> -> vector<256x128xf32>
    %c0_8 = arith.constant 0 : index
    %c0_9 = arith.constant 0 : index
    %11 = vector.load %arg5[%c0_8, %c0_9] : memref<1x128xf32, #tpu.memory_space<vmem>>, vector<1x128xf32>
    %12 = vector.broadcast %11 : vector<1x128xf32> to vector<256x128xf32>
    %13 = arith.addf %10, %12 : vector<256x128xf32>
    %14 = arith.truncf %13 : vector<256x128xf32> to vector<256x128xbf16>
    %15 = math.tanh %14 : vector<256x128xbf16>
    %c0_10 = arith.constant 0 : index
    %c0_11 = arith.constant 0 : index
    %16 = vector.load %arg6[%c0_10, %c0_11] : memref<256x128xbf16, #tpu.memory_space<vmem>>, vector<256x128xbf16>
    tpu.vector_store %arg6[%c0_10, %c0_11], %15 {strides = array<i32>} : memref<256x128xbf16, #tpu.memory_space<vmem>>, vector<256x128xbf16>,
    return
  }
  func.func @transform_0(%arg0: i32) -> (i32, i32) {
    %c0_i32 = arith.constant 0 : i32
    %c0_i32_0 = arith.constant 0 : i32
    return %arg0, %c0_i32 : i32, i32
  }
  func.func @transform_1(%arg0: i32) -> (i32, i32) {
    %c0_i32 = arith.constant 0 : i32
    %c0_i32_0 = arith.constant 0 : i32
    %c0_i32_1 = arith.constant 0 : i32
    return %c0_i32, %c0_i32_0 : i32, i32
  }
  func.func @transform_2(%arg0: i32) -> (i32, i32) {
    %c0_i32 = arith.constant 0 : i32
    %c0_i32_0 = arith.constant 0 : i32
    %c0_i32_1 = arith.constant 0 : i32
    return %c0_i32, %c0_i32_0 : i32, i32
  }
  func.func @transform_3(%arg0: i32) -> (i32, i32) {
    %c0_i32 = arith.constant 0 : i32
    %c0_i32_0 = arith.constant 0 : i32
    %c0_i32_1 = arith.constant 0 : i32
    return %c0_i32, %c0_i32_0 : i32, i32
  }
  func.func @transform_4(%arg0: i32) -> (i32, i32) {
    %c0_i32 = arith.constant 0 : i32
    %c0_i32_0 = arith.constant 0 : i32
    %c0_i32_1 = arith.constant 0 : i32
    return %c0_i32, %c0_i32_0 : i32, i32
  }
  func.func @transform_5(%arg0: i32) -> (i32, i32) {
    %c0_i32 = arith.constant 0 : i32
    %c0_i32_0 = arith.constant 0 : i32
    return %arg0, %c0_i32 : i32, i32
  }
}

</mosaic_0001>

<llo_original>
// kernel: mlp_forward.1
$region0: #{mlp_forward.1}
  #allocation0 [shape = 'u32[]', space=smem, size = 0x4, offset = 0x4, fixed_abs, tag = 'smem constant byte address 0x4 - core index']
  #allocation1 [shape = 'u32[144,128]{1,0:T(1,128)}', space=vmem, size = 0x12000, scoped, tag = 'internal scratch']
  %s0 = inlined_call_operand.vmem [shape: f32[1024,16], index: 0, kind: input, shape index: {}]
  %s1 = inlined_call_operand.vmem [shape: bf16[16,128], index: 1, kind: input, shape index: {}]
  %s2 = inlined_call_operand.vmem [shape: f32[1,128], index: 2, kind: input, shape index: {}]
  %s3 = inlined_call_operand.vmem [shape: bf16[128,128], index: 3, kind: input, shape index: {}]
  %s4 = inlined_call_operand.vmem [shape: f32[1,128], index: 4, kind: input, shape index: {}]
  %s5 = inlined_call_operand.vmem [shape: bf16[1024,128], index: 5, kind: output, shape index: {}]
  %s6 = sld [smem:[#allocation0]]
  $region53: #{mlp_forward.1} parent=0
    _
  %s8 = ssub.s32 1, %s6
  %s9 = scalar_select 0, %s8, %s6
  loop: start=0, step=1, limit=6
  $region2: #{mlp_forward.1} parent=0 // loop_pre_header
    _
  $region3: #{mlp_forward.1} parent=0 // loop_header
    %s11 = sphi 0, %s15
    %p12 = scmp.ge.s32.totalorder %s11, 6
    %s21 = sphi 0, %s23
    %s24 = sphi 0, %s21
    %s25 = sphi 0, %s24
    %s41 = sphi 0, %s25
    %s45 = sphi 0, %s45
    %s47 = sphi 0, %s45
    %s48 = sphi 0, %s47
    %s62 = sphi 0, %s48
    %s66 = sphi 0, %s66
    %s68 = sphi 0, %s66
    %s69 = sphi 0, %s68
    %s83 = sphi 0, %s69
    %s87 = sphi 0, %s87
    %s89 = sphi 0, %s87
    %s90 = sphi 0, %s89
    %s104 = sphi 0, %s90
    %s108 = sphi 0, %s108
    %s110 = sphi 0, %s108
    %s111 = sphi 0, %s110
    %s125 = sphi 0, %s111
    %s131 = sphi 0, %s133
    %s134 = sphi 0, %s131
    %s135 = sphi 0, %s134
    %s151 = sphi 0, %s135
  $region4: #{mlp_forward.1} parent=0 // loop_header_branch
    %14 = sbr.rel (%p12) target = $region8
  $region5: #{mlp_forward.1} parent=0 // loop_body
    %s16 = ssub.s32 %s11, 1
    %s17 = ssub.s32 %s11, 2
    %s18 = sadd.s32 %s11, 1
    %s19 = ssub.s32 %s11, %s18
    %p20 = scmp.eq.s32.totalorder %s19, 0
    %s22 = sadd.s32 %s21, 1
    %s23 = scalar_select %p20, %s21, %s22
    %p26 = pneg %p20
    %p27 = scmp.eq.s32.totalorder %s11, 3
    %p28 = por %p26, %p27
    %p29 = scmp.ne.s32.totalorder %s21, %s24
    %p30 = scmp.eq.s32.totalorder %s11, 0
    %p31 = por %p29, %p30
    %p32 = scmp.ne.s32.totalorder %s21, %s24
    %p33 = scmp.eq.s32.totalorder %s16, 3
    %p34 = por %p32, %p33
    %p35 = scmp.ne.s32.totalorder %s24, %s25
    %p36 = scmp.eq.s32.totalorder %s16, 0
    %p37 = por %p35, %p36
    %p38 = scmp.ne.s32.totalorder %s24, %s25
    %p39 = scmp.eq.s32.totalorder %s17, 3
    %p40 = por %p38, %p39
    %p42 = scmp.ne.s32.totalorder %s25, %s41
    %p43 = scmp.eq.s32.totalorder %s17, 0
    %p44 = por %p42, %p43
    %s46 = sadd.s32 %s45, 1
    %p49 = scmp.eq.s32.totalorder %s11, 3
    %p50 = scmp.ne.s32.totalorder %s45, %s47
    %p51 = scmp.eq.s32.totalorder %s11, 0
    %p52 = por %p50, %p51
    %p53 = scmp.ne.s32.totalorder %s45, %s47
    %p54 = scmp.eq.s32.totalorder %s16, 3
    %p55 = por %p53, %p54
    %p56 = scmp.ne.s32.totalorder %s47, %s48
    %p57 = scmp.eq.s32.totalorder %s16, 0
    %p58 = por %p56, %p57
    %p59 = scmp.ne.s32.totalorder %s47, %s48
    %p60 = scmp.eq.s32.totalorder %s17, 3
    %p61 = por %p59, %p60
    %p63 = scmp.ne.s32.totalorder %s48, %s62
    %p64 = scmp.eq.s32.totalorder %s17, 0
    %p65 = por %p63, %p64
    %s67 = sadd.s32 %s66, 1
    %p70 = scmp.eq.s32.totalorder %s11, 3
    %p71 = scmp.ne.s32.totalorder %s66, %s68
    %p72 = scmp.eq.s32.totalorder %s11, 0
    %p73 = por %p71, %p72
    %p74 = scmp.ne.s32.totalorder %s66, %s68
    %p75 = scmp.eq.s32.totalorder %s16, 3
    %p76 = por %p74, %p75
    %p77 = scmp.ne.s32.totalorder %s68, %s69
    %p78 = scmp.eq.s32.totalorder %s16, 0
    %p79 = por %p77, %p78
    %p80 = scmp.ne.s32.totalorder %s68, %s69
    %p81 = scmp.eq.s32.totalorder %s17, 3
    %p82 = por %p80, %p81
    %p84 = scmp.ne.s32.totalorder %s69, %s83
    %p85 = scmp.eq.s32.totalorder %s17, 0
    %p86 = por %p84, %p85
    %s88 = sadd.s32 %s87, 1
    %p91 = scmp.eq.s32.totalorder %s11, 3
    %p92 = scmp.ne.s32.totalorder %s87, %s89
    %p93 = scmp.eq.s32.totalorder %s11, 0
    %p94 = por %p92, %p93
    %p95 = scmp.ne.s32.totalorder %s87, %s89
    %p96 = scmp.eq.s32.totalorder %s16, 3
    %p97 = por %p95, %p96
    %p98 = scmp.ne.s32.totalorder %s89, %s90
    %p99 = scmp.eq.s32.totalorder %s16, 0
    %p100 = por %p98, %p99
    %p101 = scmp.ne.s32.totalorder %s89, %s90
    %p102 = scmp.eq.s32.totalorder %s17, 3
    %p103 = por %p101, %p102
    %p105 = scmp.ne.s32.totalorder %s90, %s104
    %p106 = scmp.eq.s32.totalorder %s17, 0
    %p107 = por %p105, %p106
    %s109 = sadd.s32 %s108, 1
    %p112 = scmp.eq.s32.totalorder %s11, 3
    %p113 = scmp.ne.s32.totalorder %s108, %s110
    %p114 = scmp.eq.s32.totalorder %s11, 0
    %p115 = por %p113, %p114
    %p116 = scmp.ne.s32.totalorder %s108, %s110
    %p117 = scmp.eq.s32.totalorder %s16, 3
    %p118 = por %p116, %p117
    %p119 = scmp.ne.s32.totalorder %s110, %s111
    %p120 = scmp.eq.s32.totalorder %s16, 0
    %p121 = por %p119, %p120
    %p122 = scmp.ne.s32.totalorder %s110, %s111
    %p123 = scmp.eq.s32.totalorder %s17, 3
    %p124 = por %p122, %p123
    %p126 = scmp.ne.s32.totalorder %s111, %s125
    %p127 = scmp.eq.s32.totalorder %s17, 0
    %p128 = por %p126, %p127
    %s129 = ssub.s32 %s11, %s18
    %p130 = scmp.eq.s32.totalorder %s129, 0
    %s132 = sadd.s32 %s131, 1
    %s133 = scalar_select %p130, %s131, %s132
    %p136 = pneg %p130
    %p137 = scmp.eq.s32.totalorder %s11, 3
    %p138 = por %p136, %p137
    %p139 = scmp.ne.s32.totalorder %s131, %s134
    %p140 = scmp.eq.s32.totalorder %s11, 0
    %p141 = por %p139, %p140
    %p142 = scmp.ne.s32.totalorder %s131, %s134
    %p143 = scmp.eq.s32.totalorder %s16, 3
    %p144 = por %p142, %p143
    %p145 = scmp.ne.s32.totalorder %s134, %s135
    %p146 = scmp.eq.s32.totalorder %s16, 0
    %p147 = por %p145, %p146
    %p148 = scmp.ne.s32.totalorder %s134, %s135
    %p149 = scmp.eq.s32.totalorder %s17, 3
    %p150 = por %p148, %p149
    %p152 = scmp.ne.s32.totalorder %s135, %s151
    %p153 = scmp.eq.s32.totalorder %s17, 0
    %p154 = por %p152, %p153
    %p155 = scmp.le.s32.totalorder 1, %s11
    %p156 = scmp.lt.s32.totalorder %s11, 5
    %p157 = pnand %p155, %p156
    %p158 = pneg %p157
    // Predicated region
    $region9: #{mlp_forward.1} parent=5 // pred_check
      _
    $region10: #{mlp_forward.1} parent=5 // pred_check_branch
      %160 = sbr.rel (%p157) target = $region12
    $region11: #{mlp_forward.1} parent=5 // pred_region
      %s161 = ssub.s32 %s11, 1
      // Predicated region
      $region13: #{mlp_forward.1} parent=11 // pred_check
        %p162 = pneg %p58
      $region14: #{mlp_forward.1} parent=11 // pred_check_branch
        %164 = sbr.rel (%p162) target = $region16
      $region15: #{mlp_forward.1} parent=11 // pred_region
        _
      $region16: #{mlp_forward.1} parent=11 // pred_fallthru
        _
      // Predicated region
      $region17: #{mlp_forward.1} parent=11 // pred_check
        %p165 = pneg %p79
      $region18: #{mlp_forward.1} parent=11 // pred_check_branch
        %167 = sbr.rel (%p165) target = $region20
      $region19: #{mlp_forward.1} parent=11 // pred_region
        _
      $region20: #{mlp_forward.1} parent=11 // pred_fallthru
        _
      // Predicated region
      $region21: #{mlp_forward.1} parent=11 // pred_check
        %p168 = pneg %p100
      $region22: #{mlp_forward.1} parent=11 // pred_check_branch
        %170 = sbr.rel (%p168) target = $region24
      $region23: #{mlp_forward.1} parent=11 // pred_region
        _
      $region24: #{mlp_forward.1} parent=11 // pred_fallthru
        _
      // Predicated region
      $region25: #{mlp_forward.1} parent=11 // pred_check
        %p171 = pneg %p121
      $region26: #{mlp_forward.1} parent=11 // pred_check_branch
        %173 = sbr.rel (%p171) target = $region28
      $region27: #{mlp_forward.1} parent=11 // pred_region
        _
      $region28: #{mlp_forward.1} parent=11 // pred_fallthru
        _
    $region12: #{mlp_forward.1} parent=5 // pred_fallthru
      _
    %p174 = scmp.lt.s32.totalorder %s11, 4
    // Predicated region
    $region29: #{mlp_forward.1} parent=5 // pred_check
      %p175 = pneg %p174
    $region30: #{mlp_forward.1} parent=5 // pred_check_branch
      %177 = sbr.rel (%p175) target = $region32
    $region31: #{mlp_forward.1} parent=5 // pred_region
      // Predicated region
      $region33: #{mlp_forward.1} parent=31 // pred_check
        %p178 = pneg %p31
      $region34: #{mlp_forward.1} parent=31 // pred_check_branch
        %180 = sbr.rel (%p178) target = $region36
      $region35: #{mlp_forward.1} parent=31 // pred_region
        %s181 = smul.u32 32, %s11
        %p182 = scmp.lt.s32.totalorder %s181, 127
        %s183 = scalar_select %p182, %s181, 127
        %s184 = smul.addr %s183, 8
        %s185 = scalar_lea.vmem %s0, %s184
        %s186 = smul.u32 32, %s11
      $region36: #{mlp_forward.1} parent=31 // pred_fallthru
        _
    $region32: #{mlp_forward.1} parent=5 // pred_fallthru
      _
    %p187 = scmp.le.s32.totalorder 1, %s11
    %p188 = scmp.lt.s32.totalorder %s11, 5
    %p189 = pnand %p187, %p188
    %p190 = pneg %p189
    // Predicated region
    $region37: #{mlp_forward.1} parent=5 // pred_check
      _
    $region38: #{mlp_forward.1} parent=5 // pred_check_branch
      %192 = sbr.rel (%p189) target = $region40
    $region39: #{mlp_forward.1} parent=5 // pred_region
      %s193 = ssub.s32 %s11, 1
      %s194 = smul.u32 32, %s16
      %p195 = scmp.lt.s32.totalorder %s194, 127
      %s196 = scalar_select %p195, %s194, 127
      %s197 = smul.addr %s196, 8
      %s198 = scalar_lea.vmem %s0, %s197
      %p199 = pneg %p37
      %p200 = pneg %p34
      %p201 = pneg %p58
      %p202 = pneg %p55
      %p203 = pneg %p79
      %p204 = pneg %p76
      %p205 = pneg %p100
      %p206 = pneg %p97
      %p207 = pneg %p121
      %p208 = pneg %p118
      %p209 = pneg %p147
      %p210 = pneg %p144
      %s211 = smul.u32 32, %s16
      %p212 = scmp.lt.s32.totalorder %s211, 127
      %s213 = scalar_select %p212, %s211, 127
      %s214 = smul.addr %s213, 4
      %s215 = scalar_lea.vmem %s5, %s214
      %s216 = smul.u32 32, %s16
      %p217 = scmp.lt.s32.totalorder %s216, 127
      %s218 = scalar_select %p217, %s216, 127
      %s219 = smul.addr %s218, 8
      %s220 = scalar_lea.vmem %s0, %s219
      %s221 = smul.u32 32, %s16
      %s222 = smul.u32 32, %s16
      %p223 = scmp.lt.s32.totalorder %s222, 127
      %s224 = scalar_select %p223, %s222, 127
      %s225 = smul.addr %s224, 4
      %s226 = scalar_lea.vmem %s5, %s225
      %s227 = smul.u32 32, %s16
      %v229 = vld [vmem:[%s220] sm:$0xff]
      %v230 = vld [vmem:[%s220 + $0x8] sm:$0xff]
      %v231 = vld [vmem:[%s220 + $0x10] sm:$0xff]
      %v232 = vld [vmem:[%s220 + $0x18] sm:$0xff]
      %v233 = vld [vmem:[%s220 + $0x20] sm:$0xff]
      %v234 = vld [vmem:[%s220 + $0x28] sm:$0xff]
      %v235 = vld [vmem:[%s220 + $0x30] sm:$0xff]
      %v236 = vld [vmem:[%s220 + $0x38] sm:$0xff]
      %v237 = vld [vmem:[%s220 + $0x40] sm:$0xff]
      %v238 = vld [vmem:[%s220 + $0x48] sm:$0xff]
      %v239 = vld [vmem:[%s220 + $0x50] sm:$0xff]
      %v240 = vld [vmem:[%s220 + $0x58] sm:$0xff]
      %v241 = vld [vmem:[%s220 + $0x60] sm:$0xff]
      %v242 = vld [vmem:[%s220 + $0x68] sm:$0xff]
      %v243 = vld [vmem:[%s220 + $0x70] sm:$0xff]
      %v244 = vld [vmem:[%s220 + $0x78] sm:$0xff]
      %v245 = vld [vmem:[%s220 + $0x80] sm:$0xff]
      %v246 = vld [vmem:[%s220 + $0x88] sm:$0xff]
      %v247 = vld [vmem:[%s220 + $0x90] sm:$0xff]
      %v248 = vld [vmem:[%s220 + $0x98] sm:$0xff]
      %v249 = vld [vmem:[%s220 + $0xa0] sm:$0xff]
      %v250 = vld [vmem:[%s220 + $0xa8] sm:$0xff]
      %v251 = vld [vmem:[%s220 + $0xb0] sm:$0xff]
      %v252 = vld [vmem:[%s220 + $0xb8] sm:$0xff]
      %v253 = vld [vmem:[%s220 + $0xc0] sm:$0xff]
      %v254 = vld [vmem:[%s220 + $0xc8] sm:$0xff]
      %v255 = vld [vmem:[%s220 + $0xd0] sm:$0xff]
      %v256 = vld [vmem:[%s220 + $0xd8] sm:$0xff]
      %v257 = vld [vmem:[%s220 + $0xe0] sm:$0xff]
      %v258 = vld [vmem:[%s220 + $0xe8] sm:$0xff]
      %v259 = vld [vmem:[%s220 + $0xf0] sm:$0xff]
      %v260 = vld [vmem:[%s220 + $0xf8] sm:$0xff]
      %v261 = vpack.c.bf16 %v230, %v229
      %v262 = vpack.c.bf16 %v232, %v231
      %v263 = vpack.c.bf16 %v234, %v233
      %v264 = vpack.c.bf16 %v236, %v235
      %v265 = vpack.c.bf16 %v238, %v237
      %v266 = vpack.c.bf16 %v240, %v239
      %v267 = vpack.c.bf16 %v242, %v241
      %v268 = vpack.c.bf16 %v244, %v243
      %v269 = vpack.c.bf16 %v246, %v245
      %v270 = vpack.c.bf16 %v248, %v247
      %v271 = vpack.c.bf16 %v250, %v249
      %v272 = vpack.c.bf16 %v252, %v251
      %v273 = vpack.c.bf16 %v254, %v253
      %v274 = vpack.c.bf16 %v256, %v255
      %v275 = vpack.c.bf16 %v258, %v257
      %v276 = vpack.c.bf16 %v260, %v259
      %v277 = vld [vmem:[%s1] sm:$0xf]
      %v278 = vld [vmem:[%s1 + $0x4] sm:$0xf]
      %v279 = vld [vmem:[%s2] sm:$0x1]
      %v281 = vlaneseq
      %v282 = vshrl.u32 %v281, 7
      %v283 = vsub.s32 0, %v282
      %v284 = vrot.slane %v279, %v283
      %v288 = vunpack.c.l.b16 %v277
      %v289 = vunpack.c.l.b16 %v278
      %v290 = vpack.c.b16 %v289, %v288
      %vm292 = vcmask 130048
      %v294 = vsel %vm292, %v261, 0
      %v297 = vsel %vm292, %v262, 0
      %v300 = vsel %vm292, %v263, 0
      %v303 = vsel %vm292, %v264, 0
      %v306 = vsel %vm292, %v265, 0
      %v309 = vsel %vm292, %v266, 0
      %v312 = vsel %vm292, %v267, 0
      %v315 = vsel %vm292, %v268, 0
      %v318 = vsel %vm292, %v269, 0
      %v321 = vsel %vm292, %v270, 0
      %v324 = vsel %vm292, %v271, 0
      %v327 = vsel %vm292, %v272, 0
      %v330 = vsel %vm292, %v273, 0
      %v333 = vsel %vm292, %v274, 0
      %v336 = vsel %vm292, %v275, 0
      %v339 = vsel %vm292, %v276, 0
      %341 = vmatprep.subr.bf16.mxu0 0
      %342 = vmatpush1.bf16.msra.mxu0 %v290
      %343 = vmatprep.subr.bf16.mxu0 0
      %344 = vmatpush1.bf16.msra.mxu0 0
      %345 = vmatprep.subr.bf16.mxu0 0
      %346 = vmatpush1.bf16.msra.mxu0 0
      %347 = vmatprep.subr.bf16.mxu0 0
      %348 = vmatpush1.bf16.msra.mxu0 0
      %349 = vmatprep.subr.bf16.mxu0 0
      %350 = vmatpush1.bf16.msra.mxu0 0
      %351 = vmatprep.subr.bf16.mxu0 0
      %352 = vmatpush1.bf16.msra.mxu0 0
      %353 = vmatprep.subr.bf16.mxu0 0
      %354 = vmatpush1.bf16.msra.mxu0 0
      %355 = vmatprep.subr.bf16.mxu0 0
      %356 = vmatpush1.bf16.msra.mxu0 0
      %357 = vmatprep.subr.bf16.mxu0 0
      %358 = vmatpush1.bf16.msra.mxu0 0
      %359 = vmatprep.subr.bf16.mxu0 0
      %360 = vmatpush1.bf16.msra.mxu0 0
      %361 = vmatprep.subr.bf16.mxu0 0
      %362 = vmatpush1.bf16.msra.mxu0 0
      %363 = vmatprep.subr.bf16.mxu0 0
      %364 = vmatpush1.bf16.msra.mxu0 0
      %365 = vmatprep.subr.bf16.mxu0 0
      %366 = vmatpush1.bf16.msra.mxu0 0
      %367 = vmatprep.subr.bf16.mxu0 0
      %368 = vmatpush1.bf16.msra.mxu0 0
      %369 = vmatprep.subr.bf16.mxu0 0
      %370 = vmatpush1.bf16.msra.mxu0 0
      %371 = vmatprep.subr.bf16.mxu0 0
      %372 = vmatpush1.bf16.msra.mxu0 0
      %373 = vmatprep.mubr.bf16.mxu0 0
      %374 = vmatmul.mubr.bf16.gmra.mrb[0].mxu0 %v294
      %v375 = vpop.f32.mrb[0].mxu0
      %v376 = vadd.f32 %v284, %v375
      %v377 = vpop.f32.mrb[0].mxu0
      %v378 = vpop.f32.mrb[0].mxu0
      %v379 = vadd.f32 %v284, %v378
      %v380 = vpop.f32.mrb[0].mxu0
      %381 = vmatprep.mubr.bf16.mxu0 0
      %382 = vmatmul.mubr.bf16.gmra.mrb[0].mxu0 %v297
      %v383 = vpop.f32.mrb[0].mxu0
      %v384 = vadd.f32 %v284, %v383
      %v385 = vpop.f32.mrb[0].mxu0
      %v386 = vpop.f32.mrb[0].mxu0
      %v387 = vadd.f32 %v284, %v386
      %v388 = vpop.f32.mrb[0].mxu0
      %389 = vmatprep.mubr.bf16.mxu0 0
      %390 = vmatmul.mubr.bf16.gmra.mrb[0].mxu0 %v300
      %v391 = vpop.f32.mrb[0].mxu0
      %v392 = vadd.f32 %v284, %v391
      %v393 = vpop.f32.mrb[0].mxu0
      %v394 = vpop.f32.mrb[0].mxu0
      %v395 = vadd.f32 %v284, %v394
      %v396 = vpop.f32.mrb[0].mxu0
      %397 = vmatprep.mubr.bf16.mxu0 0
      %398 = vmatmul.mubr.bf16.gmra.mrb[0].mxu0 %v303
      %v399 = vpop.f32.mrb[0].mxu0
      %v400 = vadd.f32 %v284, %v399
      %v401 = vpop.f32.mrb[0].mxu0
      %v402 = vpop.f32.mrb[0].mxu0
      %v403 = vadd.f32 %v284, %v402
      %v404 = vpop.f32.mrb[0].mxu0
      %405 = vmatprep.mubr.bf16.mxu0 0
      %406 = vmatmul.mubr.bf16.gmra.mrb[0].mxu0 %v306
      %v407 = vpop.f32.mrb[0].mxu0
      %v408 = vadd.f32 %v284, %v407
      %v409 = vpop.f32.mrb[0].mxu0
      %v410 = vpop.f32.mrb[0].mxu0
      %v411 = vadd.f32 %v284, %v410
      %v412 = vpop.f32.mrb[0].mxu0
      %413 = vmatprep.mubr.bf16.mxu0 0
      %414 = vmatmul.mubr.bf16.gmra.mrb[0].mxu0 %v309
      %v415 = vpop.f32.mrb[0].mxu0
      %v416 = vadd.f32 %v284, %v415
      %v417 = vpop.f32.mrb[0].mxu0
      %v418 = vpop.f32.mrb[0].mxu0
      %v419 = vadd.f32 %v284, %v418
      %v420 = vpop.f32.mrb[0].mxu0
      %421 = vmatprep.mubr.bf16.mxu0 0
      %422 = vmatmul.mubr.bf16.gmra.mrb[0].mxu0 %v312
      %v423 = vpop.f32.mrb[0].mxu0
      %v424 = vadd.f32 %v284, %v423
      %v425 = vpop.f32.mrb[0].mxu0
      %v426 = vpop.f32.mrb[0].mxu0
      %v427 = vadd.f32 %v284, %v426
      %v428 = vpop.f32.mrb[0].mxu0
      %429 = vmatprep.mubr.bf16.mxu0 0
      %430 = vmatmul.mubr.bf16.gmra.mrb[0].mxu0 %v315
      %v431 = vpop.f32.mrb[0].mxu0
      %v432 = vadd.f32 %v284, %v431
      %v433 = vpop.f32.mrb[0].mxu0
      %v434 = vpop.f32.mrb[0].mxu0
      %v435 = vadd.f32 %v284, %v434
      %v436 = vpop.f32.mrb[0].mxu0
      %437 = vmatprep.mubr.bf16.mxu0 0
      %438 = vmatmul.mubr.bf16.gmra.mrb[0].mxu0 %v318
      %v439 = vpop.f32.mrb[0].mxu0
      %v440 = vadd.f32 %v284, %v439
      %v441 = vpop.f32.mrb[0].mxu0
      %v442 = vpop.f32.mrb[0].mxu0
      %v443 = vadd.f32 %v284, %v442
      %v444 = vpop.f32.mrb[0].mxu0
      %445 = vmatprep.mubr.bf16.mxu0 0
      %446 = vmatmul.mubr.bf16.gmra.mrb[0].mxu0 %v321
      %v447 = vpop.f32.mrb[0].mxu0
      %v448 = vadd.f32 %v284, %v447
      %v449 = vpop.f32.mrb[0].mxu0
      %v450 = vpop.f32.mrb[0].mxu0
      %v451 = vadd.f32 %v284, %v450
      %v452 = vpop.f32.mrb[0].mxu0
      %453 = vmatprep.mubr.bf16.mxu0 0
      %454 = vmatmul.mubr.bf16.gmra.mrb[0].mxu0 %v324
      %v455 = vpop.f32.mrb[0].mxu0
      %v456 = vadd.f32 %v284, %v455
      %v457 = vpop.f32.mrb[0].mxu0
      %v458 = vpop.f32.mrb[0].mxu0
      %v459 = vadd.f32 %v284, %v458
      %v460 = vpop.f32.mrb[0].mxu0
      %461 = vmatprep.mubr.bf16.mxu0 0
      %462 = vmatmul.mubr.bf16.gmra.mrb[0].mxu0 %v327
      %v463 = vpop.f32.mrb[0].mxu0
      %v464 = vadd.f32 %v284, %v463
      %v465 = vpop.f32.mrb[0].mxu0
      %v466 = vpop.f32.mrb[0].mxu0
      %v467 = vadd.f32 %v284, %v466
      %v468 = vpop.f32.mrb[0].mxu0
      %469 = vmatprep.mubr.bf16.mxu0 0
      %470 = vmatmul.mubr.bf16.gmra.mrb[0].mxu0 %v330
      %v471 = vpop.f32.mrb[0].mxu0
      %v472 = vadd.f32 %v284, %v471
      %v473 = vpop.f32.mrb[0].mxu0
      %v474 = vpop.f32.mrb[0].mxu0
      %v475 = vadd.f32 %v284, %v474
      %v476 = vpop.f32.mrb[0].mxu0
      %477 = vmatprep.mubr.bf16.mxu0 0
      %478 = vmatmul.mubr.bf16.gmra.mrb[0].mxu0 %v333
      %v479 = vpop.f32.mrb[0].mxu0
      %v480 = vadd.f32 %v284, %v479
      %v481 = vpop.f32.mrb[0].mxu0
      %v482 = vpop.f32.mrb[0].mxu0
      %v483 = vadd.f32 %v284, %v482
      %v484 = vpop.f32.mrb[0].mxu0
      %485 = vmatprep.mubr.bf16.mxu0 0
      %486 = vmatmul.mubr.bf16.gmra.mrb[0].mxu0 %v336
      %v487 = vpop.f32.mrb[0].mxu0
      %v488 = vadd.f32 %v284, %v487
      %v489 = vpop.f32.mrb[0].mxu0
      %v490 = vpop.f32.mrb[0].mxu0
      %v491 = vadd.f32 %v284, %v490
      %v492 = vpop.f32.mrb[0].mxu0
      %493 = vmatprep.mubr.bf16.mxu0 0
      %494 = vmatmul.mubr.bf16.gmra.mrb[0].mxu0 %v339
      %v495 = vpop.f32.mrb[0].mxu0
      %v496 = vadd.f32 %v284, %v495
      %v497 = vpop.f32.mrb[0].mxu0
      %v498 = vpop.f32.mrb[0].mxu0
      %v499 = vadd.f32 %v284, %v498
      %v500 = vpop.f32.mrb[0].mxu0
      %501 = vdwg.mxu0
      %v502 = vpack.c.bf16 %v379, %v376
      %v503 = vpack.c.bf16 %v387, %v384
      %v504 = vpack.c.bf16 %v395, %v392
      %v505 = vpack.c.bf16 %v403, %v400
      %v506 = vpack.c.bf16 %v411, %v408
      %v507 = vpack.c.bf16 %v419, %v416
      %v508 = vpack.c.bf16 %v427, %v424
      %v509 = vpack.c.bf16 %v435, %v432
      %v510 = vpack.c.bf16 %v443, %v440
      %v511 = vpack.c.bf16 %v451, %v448
      %v512 = vpack.c.bf16 %v459, %v456
      %v513 = vpack.c.bf16 %v467, %v464
      %v514 = vpack.c.bf16 %v475, %v472
      %v515 = vpack.c.bf16 %v483, %v480
      %v516 = vpack.c.bf16 %v491, %v488
      %v517 = vpack.c.bf16 %v499, %v496
      %v518 = vtanh.bf16.pop %v502
      %v519 = vtanh.bf16.pop %v503
      %v520 = vtanh.bf16.pop %v504
      %v521 = vtanh.bf16.pop %v505
      %v522 = vtanh.bf16.pop %v506
      %v523 = vtanh.bf16.pop %v507
      %v524 = vtanh.bf16.pop %v508
      %v525 = vtanh.bf16.pop %v509
      %v526 = vtanh.bf16.pop %v510
      %v527 = vtanh.bf16.pop %v511
      %v528 = vtanh.bf16.pop %v512
      %v529 = vtanh.bf16.pop %v513
      %v530 = vtanh.bf16.pop %v514
      %v531 = vtanh.bf16.pop %v515
      %v532 = vtanh.bf16.pop %v516
      %v533 = vtanh.bf16.pop %v517
      %v534 = vld [vmem:[%s3] sm:$0xf]
      %v535 = vld [vmem:[%s3 + $0x4] sm:$0xf]
      %v536 = vld [vmem:[%s3 + $0x8] sm:$0xf]
      %v537 = vld [vmem:[%s3 + $0xc] sm:$0xf]
      %v538 = vld [vmem:[%s3 + $0x10] sm:$0xf]
      %v539 = vld [vmem:[%s3 + $0x14] sm:$0xf]
      %v540 = vld [vmem:[%s3 + $0x18] sm:$0xf]
      %v541 = vld [vmem:[%s3 + $0x1c] sm:$0xf]
      %v542 = vld [vmem:[%s3 + $0x20] sm:$0xf]
      %v543 = vld [vmem:[%s3 + $0x24] sm:$0xf]
      %v544 = vld [vmem:[%s3 + $0x28] sm:$0xf]
      %v545 = vld [vmem:[%s3 + $0x2c] sm:$0xf]
      %v546 = vld [vmem:[%s3 + $0x30] sm:$0xf]
      %v547 = vld [vmem:[%s3 + $0x34] sm:$0xf]
      %v548 = vld [vmem:[%s3 + $0x38] sm:$0xf]
      %v549 = vld [vmem:[%s3 + $0x3c] sm:$0xf]
      %v550 = vld [vmem:[%s4] sm:$0x1]
      %v552 = vlaneseq
      %v553 = vshrl.u32 %v552, 7
      %v554 = vsub.s32 0, %v553
      %v555 = vrot.slane %v550, %v554
      %v573 = vunpack.c.l.b16 %v534
      %v574 = vunpack.c.l.b16 %v535
      %v575 = vunpack.c.l.b16 %v536
      %v576 = vunpack.c.l.b16 %v537
      %v577 = vunpack.c.l.b16 %v538
      %v578 = vunpack.c.l.b16 %v539
      %v579 = vunpack.c.l.b16 %v540
      %v580 = vunpack.c.l.b16 %v541
      %v581 = vunpack.c.l.b16 %v542
      %v582 = vunpack.c.l.b16 %v543
      %v583 = vunpack.c.l.b16 %v544
      %v584 = vunpack.c.l.b16 %v545
      %v585 = vunpack.c.l.b16 %v546
      %v586 = vunpack.c.l.b16 %v547
      %v587 = vunpack.c.l.b16 %v548
      %v588 = vunpack.c.l.b16 %v549
      %v589 = vpack.c.b16 %v574, %v573
      %v590 = vpack.c.b16 %v576, %v575
      %v591 = vpack.c.b16 %v578, %v577
      %v592 = vpack.c.b16 %v580, %v579
      %v593 = vpack.c.b16 %v582, %v581
      %v594 = vpack.c.b16 %v584, %v583
      %v595 = vpack.c.b16 %v586, %v585
      %v596 = vpack.c.b16 %v588, %v587
      %605 = vmatprep.subr.bf16.mxu0 0
      %606 = vmatpush1.bf16.msra.mxu0 %v589
      %607 = vmatprep.subr.bf16.mxu0 0
      %608 = vmatpush1.bf16.msra.mxu0 %v590
      %609 = vmatprep.subr.bf16.mxu0 0
      %610 = vmatpush1.bf16.msra.mxu0 %v591
      %611 = vmatprep.subr.bf16.mxu0 0
      %612 = vmatpush1.bf16.msra.mxu0 %v592
      %613 = vmatprep.subr.bf16.mxu0 0
      %614 = vmatpush1.bf16.msra.mxu0 %v593
      %615 = vmatprep.subr.bf16.mxu0 0
      %616 = vmatpush1.bf16.msra.mxu0 %v594
      %617 = vmatprep.subr.bf16.mxu0 0
      %618 = vmatpush1.bf16.msra.mxu0 %v595
      %619 = vmatprep.subr.bf16.mxu0 0
      %620 = vmatpush1.bf16.msra.mxu0 %v596
      %621 = vmatprep.subr.bf16.mxu0 0
      %622 = vmatpush1.bf16.msra.mxu0 0
      %623 = vmatprep.subr.bf16.mxu0 0
      %624 = vmatpush1.bf16.msra.mxu0 0
      %625 = vmatprep.subr.bf16.mxu0 0
      %626 = vmatpush1.bf16.msra.mxu0 0
      %627 = vmatprep.subr.bf16.mxu0 0
      %628 = vmatpush1.bf16.msra.mxu0 0
      %629 = vmatprep.subr.bf16.mxu0 0
      %630 = vmatpush1.bf16.msra.mxu0 0
      %631 = vmatprep.subr.bf16.mxu0 0
      %632 = vmatpush1.bf16.msra.mxu0 0
      %633 = vmatprep.subr.bf16.mxu0 0
      %634 = vmatpush1.bf16.msra.mxu0 0
      %635 = vmatprep.subr.bf16.mxu0 0
      %636 = vmatpush1.bf16.msra.mxu0 0
      %637 = vmatprep.mubr.bf16.mxu0 0
      %638 = vmatmul.mubr.bf16.gmra.mrb[0].mxu0 %v518
      %v639 = vpop.f32.mrb[0].mxu0
      %v640 = vadd.f32 %v555, %v639
      %v641 = vpop.f32.mrb[0].mxu0
      %v642 = vpop.f32.mrb[0].mxu0
      %v643 = vadd.f32 %v555, %v642
      %v644 = vpop.f32.mrb[0].mxu0
      %645 = vmatprep.mubr.bf16.mxu0 0
      %646 = vmatmul.mubr.bf16.gmra.mrb[0].mxu0 %v519
      %v647 = vpop.f32.mrb[0].mxu0
      %v648 = vadd.f32 %v555, %v647
      %v649 = vpop.f32.mrb[0].mxu0
      %v650 = vpop.f32.mrb[0].mxu0
      %v651 = vadd.f32 %v555, %v650
      %v652 = vpop.f32.mrb[0].mxu0
      %653 = vmatprep.mubr.bf16.mxu0 0
      %654 = vmatmul.mubr.bf16.gmra.mrb[0].mxu0 %v520
      %v655 = vpop.f32.mrb[0].mxu0
      %v656 = vadd.f32 %v555, %v655
      %v657 = vpop.f32.mrb[0].mxu0
      %v658 = vpop.f32.mrb[0].mxu0
      %v659 = vadd.f32 %v555, %v658
      %v660 = vpop.f32.mrb[0].mxu0
      %661 = vmatprep.mubr.bf16.mxu0 0
      %662 = vmatmul.mubr.bf16.gmra.mrb[0].mxu0 %v521
      %v663 = vpop.f32.mrb[0].mxu0
      %v664 = vadd.f32 %v555, %v663
      %v665 = vpop.f32.mrb[0].mxu0
      %v666 = vpop.f32.mrb[0].mxu0
      %v667 = vadd.f32 %v555, %v666
      %v668 = vpop.f32.mrb[0].mxu0
      %669 = vmatprep.mubr.bf16.mxu0 0
      %670 = vmatmul.mubr.bf16.gmra.mrb[0].mxu0 %v522
      %v671 = vpop.f32.mrb[0].mxu0
      %v672 = vadd.f32 %v555, %v671
      %v673 = vpop.f32.mrb[0].mxu0
      %v674 = vpop.f32.mrb[0].mxu0
      %v675 = vadd.f32 %v555, %v674
      %v676 = vpop.f32.mrb[0].mxu0
      %677 = vmatprep.mubr.bf16.mxu0 0
      %678 = vmatmul.mubr.bf16.gmra.mrb[0].mxu0 %v523
      %v679 = vpop.f32.mrb[0].mxu0
      %v680 = vadd.f32 %v555, %v679
      %v681 = vpop.f32.mrb[0].mxu0
      %v682 = vpop.f32.mrb[0].mxu0
      %v683 = vadd.f32 %v555, %v682
      %v684 = vpop.f32.mrb[0].mxu0
      %685 = vmatprep.mubr.bf16.mxu0 0
      %686 = vmatmul.mubr.bf16.gmra.mrb[0].mxu0 %v524
      %v687 = vpop.f32.mrb[0].mxu0
      %v688 = vadd.f32 %v555, %v687
      %v689 = vpop.f32.mrb[0].mxu0
      %v690 = vpop.f32.mrb[0].mxu0
      %v691 = vadd.f32 %v555, %v690
      %v692 = vpop.f32.mrb[0].mxu0
      %693 = vmatprep.mubr.bf16.mxu0 0
      %694 = vmatmul.mubr.bf16.gmra.mrb[0].mxu0 %v525
      %v695 = vpop.f32.mrb[0].mxu0
      %v696 = vadd.f32 %v555, %v695
      %v697 = vpop.f32.mrb[0].mxu0
      %v698 = vpop.f32.mrb[0].mxu0
      %v699 = vadd.f32 %v555, %v698
      %v700 = vpop.f32.mrb[0].mxu0
      %701 = vmatprep.mubr.bf16.mxu0 0
      %702 = vmatmul.mubr.bf16.gmra.mrb[0].mxu0 %v526
      %v703 = vpop.f32.mrb[0].mxu0
      %v704 = vadd.f32 %v555, %v703
      %v705 = vpop.f32.mrb[0].mxu0
      %v706 = vpop.f32.mrb[0].mxu0
      %v707 = vadd.f32 %v555, %v706
      %v708 = vpop.f32.mrb[0].mxu0
      %709 = vmatprep.mubr.bf16.mxu0 0
      %710 = vmatmul.mubr.bf16.gmra.mrb[0].mxu0 %v527
      %v711 = vpop.f32.mrb[0].mxu0
      %v712 = vadd.f32 %v555, %v711
      %v713 = vpop.f32.mrb[0].mxu0
      %v714 = vpop.f32.mrb[0].mxu0
      %v715 = vadd.f32 %v555, %v714
      %v716 = vpop.f32.mrb[0].mxu0
      %717 = vmatprep.mubr.bf16.mxu0 0
      %718 = vmatmul.mubr.bf16.gmra.mrb[0].mxu0 %v528
      %v719 = vpop.f32.mrb[0].mxu0
      %v720 = vadd.f32 %v555, %v719
      %v721 = vpop.f32.mrb[0].mxu0
      %v722 = vpop.f32.mrb[0].mxu0
      %v723 = vadd.f32 %v555, %v722
      %v724 = vpop.f32.mrb[0].mxu0
      %725 = vmatprep.mubr.bf16.mxu0 0
      %726 = vmatmul.mubr.bf16.gmra.mrb[0].mxu0 %v529
      %v727 = vpop.f32.mrb[0].mxu0
      %v728 = vadd.f32 %v555, %v727
      %v729 = vpop.f32.mrb[0].mxu0
      %v730 = vpop.f32.mrb[0].mxu0
      %v731 = vadd.f32 %v555, %v730
      %v732 = vpop.f32.mrb[0].mxu0
      %733 = vmatprep.mubr.bf16.mxu0 0
      %734 = vmatmul.mubr.bf16.gmra.mrb[0].mxu0 %v530
      %v735 = vpop.f32.mrb[0].mxu0
      %v736 = vadd.f32 %v555, %v735
      %v737 = vpop.f32.mrb[0].mxu0
      %v738 = vpop.f32.mrb[0].mxu0
      %v739 = vadd.f32 %v555, %v738
      %v740 = vpop.f32.mrb[0].mxu0
      %741 = vmatprep.mubr.bf16.mxu0 0
      %742 = vmatmul.mubr.bf16.gmra.mrb[0].mxu0 %v531
      %v743 = vpop.f32.mrb[0].mxu0
      %v744 = vadd.f32 %v555, %v743
      %v745 = vpop.f32.mrb[0].mxu0
      %v746 = vpop.f32.mrb[0].mxu0
      %v747 = vadd.f32 %v555, %v746
      %v748 = vpop.f32.mrb[0].mxu0
      %749 = vmatprep.mubr.bf16.mxu0 0
      %750 = vmatmul.mubr.bf16.gmra.mrb[0].mxu0 %v532
      %v751 = vpop.f32.mrb[0].mxu0
      %v752 = vadd.f32 %v555, %v751
      %v753 = vpop.f32.mrb[0].mxu0
      %v754 = vpop.f32.mrb[0].mxu0
      %v755 = vadd.f32 %v555, %v754
      %v756 = vpop.f32.mrb[0].mxu0
      %757 = vmatprep.mubr.bf16.mxu0 0
      %758 = vmatmul.mubr.bf16.gmra.mrb[0].mxu0 %v533
      %v759 = vpop.f32.mrb[0].mxu0
      %v760 = vadd.f32 %v555, %v759
      %v761 = vpop.f32.mrb[0].mxu0
      %v762 = vpop.f32.mrb[0].mxu0
      %v763 = vadd.f32 %v555, %v762
      %v764 = vpop.f32.mrb[0].mxu0
      %765 = vdwg.mxu0
      %v766 = vpack.c.bf16 %v643, %v640
      %v767 = vpack.c.bf16 %v651, %v648
      %v768 = vpack.c.bf16 %v659, %v656
      %v769 = vpack.c.bf16 %v667, %v664
      %v770 = vpack.c.bf16 %v675, %v672
      %v771 = vpack.c.bf16 %v683, %v680
      %v772 = vpack.c.bf16 %v691, %v688
      %v773 = vpack.c.bf16 %v699, %v696
      %v774 = vpack.c.bf16 %v707, %v704
      %v775 = vpack.c.bf16 %v715, %v712
      %v776 = vpack.c.bf16 %v723, %v720
      %v777 = vpack.c.bf16 %v731, %v728
      %v778 = vpack.c.bf16 %v739, %v736
      %v779 = vpack.c.bf16 %v747, %v744
      %v780 = vpack.c.bf16 %v755, %v752
      %v781 = vpack.c.bf16 %v763, %v760
      %v782 = vtanh.bf16.pop %v766
      %v783 = vtanh.bf16.pop %v767
      %v784 = vtanh.bf16.pop %v768
      %v785 = vtanh.bf16.pop %v769
      %v786 = vtanh.bf16.pop %v770
      %v787 = vtanh.bf16.pop %v771
      %v788 = vtanh.bf16.pop %v772
      %v789 = vtanh.bf16.pop %v773
      %v790 = vtanh.bf16.pop %v774
      %v791 = vtanh.bf16.pop %v775
      %v792 = vtanh.bf16.pop %v776
      %v793 = vtanh.bf16.pop %v777
      %v794 = vtanh.bf16.pop %v778
      %v795 = vtanh.bf16.pop %v779
      %v796 = vtanh.bf16.pop %v780
      %v797 = vtanh.bf16.pop %v781
      %v814 = vunpack.c.l.b16 %v782
      %v815 = vunpack.c.h.b16 %v782
      %v816 = vunpack.c.l.b16 %v783
      %v817 = vunpack.c.h.b16 %v783
      %v818 = vunpack.c.l.b16 %v784
      %v819 = vunpack.c.h.b16 %v784
      %v820 = vunpack.c.l.b16 %v785
      %v821 = vunpack.c.h.b16 %v785
      %v822 = vunpack.c.l.b16 %v786
      %v823 = vunpack.c.h.b16 %v786
      %v824 = vunpack.c.l.b16 %v787
      %v825 = vunpack.c.h.b16 %v787
      %v826 = vunpack.c.l.b16 %v788
      %v827 = vunpack.c.h.b16 %v788
      %v828 = vunpack.c.l.b16 %v789
      %v829 = vunpack.c.h.b16 %v789
      %v830 = vunpack.c.l.b16 %v790
      %v831 = vunpack.c.h.b16 %v790
      %v832 = vunpack.c.l.b16 %v791
      %v833 = vunpack.c.h.b16 %v791
      %v834 = vunpack.c.l.b16 %v792
      %v835 = vunpack.c.h.b16 %v792
      %v836 = vunpack.c.l.b16 %v793
      %v837 = vunpack.c.h.b16 %v793
      %v838 = vunpack.c.l.b16 %v794
      %v839 = vunpack.c.h.b16 %v794
      %v840 = vunpack.c.l.b16 %v795
      %v841 = vunpack.c.h.b16 %v795
      %v842 = vunpack.c.l.b16 %v796
      %v843 = vunpack.c.h.b16 %v796
      %v844 = vunpack.c.l.b16 %v797
      %v845 = vunpack.c.h.b16 %v797
      %v846 = vpack.c.b16 %v814, %v814
      %v847 = vpack.c.b16 %v815, %v815
      %v848 = vpack.c.b16 %v816, %v816
      %v849 = vpack.c.b16 %v817, %v817
      %v850 = vpack.c.b16 %v818, %v818
      %v851 = vpack.c.b16 %v819, %v819
      %v852 = vpack.c.b16 %v820, %v820
      %v853 = vpack.c.b16 %v821, %v821
      %v854 = vpack.c.b16 %v822, %v822
      %v855 = vpack.c.b16 %v823, %v823
      %v856 = vpack.c.b16 %v824, %v824
      %v857 = vpack.c.b16 %v825, %v825
      %v858 = vpack.c.b16 %v826, %v826
      %v859 = vpack.c.b16 %v827, %v827
      %v860 = vpack.c.b16 %v828, %v828
      %v861 = vpack.c.b16 %v829, %v829
      %v862 = vpack.c.b16 %v830, %v830
      %v863 = vpack.c.b16 %v831, %v831
      %v864 = vpack.c.b16 %v832, %v832
      %v865 = vpack.c.b16 %v833, %v833
      %v866 = vpack.c.b16 %v834, %v834
      %v867 = vpack.c.b16 %v835, %v835
      %v868 = vpack.c.b16 %v836, %v836
      %v869 = vpack.c.b16 %v837, %v837
      %v870 = vpack.c.b16 %v838, %v838
      %v871 = vpack.c.b16 %v839, %v839
      %v872 = vpack.c.b16 %v840, %v840
      %v873 = vpack.c.b16 %v841, %v841
      %v874 = vpack.c.b16 %v842, %v842
      %v875 = vpack.c.b16 %v843, %v843
      %v876 = vpack.c.b16 %v844, %v844
      %v877 = vpack.c.b16 %v845, %v845
      %910 = vst [vmem:[%s226] sm:$0xf] %v846
      %911 = vst [vmem:[%s226 + $0x4] sm:$0xf] %v847
      %912 = vst [vmem:[%s226 + $0x8] sm:$0xf] %v848
      %913 = vst [vmem:[%s226 + $0xc] sm:$0xf] %v849
      %914 = vst [vmem:[%s226 + $0x10] sm:$0xf] %v850
      %915 = vst [vmem:[%s226 + $0x14] sm:$0xf] %v851
      %916 = vst [vmem:[%s226 + $0x18] sm:$0xf] %v852
      %917 = vst [vmem:[%s226 + $0x1c] sm:$0xf] %v853
      %918 = vst [vmem:[%s226 + $0x20] sm:$0xf] %v854
      %919 = vst [vmem:[%s226 + $0x24] sm:$0xf] %v855
      %920 = vst [vmem:[%s226 + $0x28] sm:$0xf] %v856
      %921 = vst [vmem:[%s226 + $0x2c] sm:$0xf] %v857
      %922 = vst [vmem:[%s226 + $0x30] sm:$0xf] %v858
      %923 = vst [vmem:[%s226 + $0x34] sm:$0xf] %v859
      %924 = vst [vmem:[%s226 + $0x38] sm:$0xf] %v860
      %925 = vst [vmem:[%s226 + $0x3c] sm:$0xf] %v861
      %926 = vst [vmem:[%s226 + $0x40] sm:$0xf] %v862
      %927 = vst [vmem:[%s226 + $0x44] sm:$0xf] %v863
      %928 = vst [vmem:[%s226 + $0x48] sm:$0xf] %v864
      %929 = vst [vmem:[%s226 + $0x4c] sm:$0xf] %v865
      %930 = vst [vmem:[%s226 + $0x50] sm:$0xf] %v866
      %931 = vst [vmem:[%s226 + $0x54] sm:$0xf] %v867
      %932 = vst [vmem:[%s226 + $0x58] sm:$0xf] %v868
      %933 = vst [vmem:[%s226 + $0x5c] sm:$0xf] %v869
      %934 = vst [vmem:[%s226 + $0x60] sm:$0xf] %v870
      %935 = vst [vmem:[%s226 + $0x64] sm:$0xf] %v871
      %936 = vst [vmem:[%s226 + $0x68] sm:$0xf] %v872
      %937 = vst [vmem:[%s226 + $0x6c] sm:$0xf] %v873
      %938 = vst [vmem:[%s226 + $0x70] sm:$0xf] %v874
      %939 = vst [vmem:[%s226 + $0x74] sm:$0xf] %v875
      %940 = vst [vmem:[%s226 + $0x78] sm:$0xf] %v876
      %941 = vst [vmem:[%s226 + $0x7c] sm:$0xf] %v877
      %s942 = smul.u32 32, %s16
      %p943 = scmp.lt.s32.totalorder %s942, 127
      %s944 = scalar_select %p943, %s942, 127
      %s945 = smul.addr %s944, 4
      %s946 = scalar_lea.vmem %s5, %s945
      // Predicated region
      $region41: #{mlp_forward.1} parent=39 // pred_check
        %p947 = pneg %p144
      $region42: #{mlp_forward.1} parent=39 // pred_check_branch
        %949 = sbr.rel (%p947) target = $region44
      $region43: #{mlp_forward.1} parent=39 // pred_region
        %s950 = smul.u32 32, %s16
      $region44: #{mlp_forward.1} parent=39 // pred_fallthru
        _
    $region40: #{mlp_forward.1} parent=5 // pred_fallthru
      _
    %p951 = scmp.le.s32.totalorder 2, %s11
    // Predicated region
    $region45: #{mlp_forward.1} parent=5 // pred_check
      %p952 = pneg %p951
    $region46: #{mlp_forward.1} parent=5 // pred_check_branch
      %954 = sbr.rel (%p952) target = $region48
    $region47: #{mlp_forward.1} parent=5 // pred_region
      %s955 = ssub.s32 %s11, 2
      // Predicated region
      $region49: #{mlp_forward.1} parent=47 // pred_check
        %p956 = pneg %p150
      $region50: #{mlp_forward.1} parent=47 // pred_check_branch
        %958 = sbr.rel (%p956) target = $region52
      $region51: #{mlp_forward.1} parent=47 // pred_region
        %s959 = smul.u32 32, %s17
        %p960 = scmp.lt.s32.totalorder %s959, 127
        %s961 = scalar_select %p960, %s959, 127
        %s962 = smul.addr %s961, 4
        %s963 = scalar_lea.vmem %s5, %s962
      $region52: #{mlp_forward.1} parent=47 // pred_fallthru
        _
    $region48: #{mlp_forward.1} parent=5 // pred_fallthru
      _
  $region6: #{mlp_forward.1} parent=0 // loop_footer
    %s15 = sadd.s32 1, %s11
  $region7: #{mlp_forward.1} parent=0 // loop_footer_branch
    %10 = sbr.rel target = $region3
  $region8: #{mlp_forward.1} parent=0 // loop_exit
    _

</llo_original>
